<compile_context>
chip_gen: v7x
topology: tpu7x:2x2x1
jax: 0.10.0
libtpu: 0.0.40
codegen_flags: <defaults>
</compile_context>

<pallas_src>
from functools import partial

import jax
import jax.numpy as jnp
from jax import lax
from jax.experimental import pallas as pl
from jax.experimental.pallas import tpu as pltpu

# ----------------------------- model constants ------------------------------
HS = [32, 48, 64]
KS = [13, 9, 5, 5, 10, 13]
PAD = [6, 4, 2, 2, 4, 6]
L_IN = 230                 # hard-coded input length used by the torch FC sizing
L1P = L_IN // 2            # 115 after pool1
L2P = L1P // 2             # 57  after pool2
L3 = L2P                   # 57  after encoder3 conv
FLATTEN = L3 * HS[2]       # 3648
FC1 = FLATTEN // 2         # 1824
EMB = FC1 // 2             # 912
BN_EPS = 1e-5
N_BATCH = 2


def _round_up(v, m):
    return ((v + m - 1) // m) * m


FLATTEN_P = _round_up(FLATTEN, 128)   # 3712
FC1_P = _round_up(FC1, 128)           # 1920
EMB_P = _round_up(EMB, 128)           # 1024
M_PAD = 16                            # bf16 packs 16 sublanes per vreg
W_WIDE = 256                          # lane buffer for the L=230 stages (>= 230 + 6)
W_NARROW = 128                        # lane buffer for the L<=115 stages (>= 115 + 5)


# --------------------------- in-kernel helpers ------------------------------

def _conv1d_roll(x, w_ref, pad, scale, shift, roll_sign, relu=True):
    """Conv1d(stride=1, padding=pad) on a lane-padded (C_in, W) block.

    x must be zero on columns >= L_in and W >= L_in + pad; with that invariant a
    cyclic lane rotation per tap reproduces exact zero padding, so each tap is
    one pltpu.roll (XLU) + one MXU dot.  Output columns >= L_out hold garbage
    that downstream stages mask away or never read.
    """
    k_size, c_out, c_in = w_ref.shape
    width = x.shape[1]
    acc = jnp.zeros((c_out, width), jnp.float32)
    for k in range(k_size):
        amt = (roll_sign * (pad - k)) % width          # static, non-negative
        xs = pltpu.roll(x, shift=amt, axis=1) if amt else x
        w_k = w_ref[k]                                 # (C_out, C_in)
        if c_in == 1:
            acc = acc + w_k * xs                       # (C_out,1)*(1,W) on the VPU
        else:
            acc = acc + jnp.dot(w_k, xs, preferred_element_type=jnp.float32)
    y = acc * scale + shift
    return jnp.maximum(y, 0.0) if relu else y


def _pool_pair_matrices(w_in, w_out, n_pairs):
    """0/1 matrices selecting even / odd lanes of each pool pair (built once per layer)."""
    r = lax.broadcasted_iota(jnp.int32, (w_in, w_out), 0)
    q = lax.broadcasted_iota(jnp.int32, (w_in, w_out), 1)
    ok = q < n_pairs
    sel_e = jnp.where((r == 2 * q) & ok, 1.0, 0.0)
    sel_o = jnp.where((r == 2 * q + 1) & ok, 1.0, 0.0)
    return sel_e, sel_o


def _unpool_pair_matrices(w_in, w_out, n_pairs):
    """0/1 matrices scattering pooled lanes back to even / odd slots (built once per layer)."""
    r = lax.broadcasted_iota(jnp.int32, (w_in, w_out), 0)
    j = lax.broadcasted_iota(jnp.int32, (w_in, w_out), 1)
    ok = r < n_pairs
    put_e = jnp.where((j == 2 * r) & ok, 1.0, 0.0)
    put_o = jnp.where((j == 2 * r + 1) & ok, 1.0, 0.0)
    return put_e, put_o


def _maxpool2(x, sel_e, sel_o):
    """MaxPool1d(2,2): returns pooled values and a 0/1 'odd element won' pair mask."""
    even = jnp.dot(x, sel_e, preferred_element_type=jnp.float32)
    odd = jnp.dot(x, sel_o, preferred_element_type=jnp.float32)
    mask_odd = jnp.where(odd > even, 1.0, 0.0)   # strict '>' keeps the first elem on ties
    return jnp.maximum(even, odd), mask_odd


def _maxunpool2(v, mask_odd, put_e, put_o):
    """MaxUnpool1d(2,2) with the 0/1 pair mask (== torch indices for kernel==stride==2)."""
    return (jnp.dot(v * (1.0 - mask_odd), put_e, preferred_element_type=jnp.float32)
            + jnp.dot(v * mask_odd, put_o, preferred_element_type=jnp.float32))


# ------------------------------ fused kernel --------------------------------

def _fused_forward_kernel(
    # inputs (VMEM)
    x_ref,
    e1w_ref, e1s_ref, e1t_ref,
    e2w_ref, e2s_ref, e2t_ref,
    e3w_ref, e3s_ref, e3t_ref,
    d1w_ref, d1s_ref, d1t_ref,
    d2w_ref, d2s_ref, d2t_ref,
    d3w_ref, d3s_ref, d3t_ref,
    b1_ref, b2_ref, b3_ref, b4_ref,
    # inputs (HBM / pl.ANY)
    w1_hbm, w2_hbm, w3_hbm, w4_hbm,
    # outputs
    enc_out_ref,                       # (2, 912)  f32
    dec_out_ref,                       # (2, 230)  f32
    # scratch
    w1_buf, w2_buf, w3_buf, w4_buf,    # resident bf16 FC weight slabs
    xfc_ref,                           # (16, 3712) f32  flattened FC input staging
    h4_ref,                            # (16, 3712) f32  fc4 output staging
    dec_in_ref,                        # (128, 128) f32  decoder conv working layout
    dma_sem,                           # DMA semaphores (4,)
    *, roll_sign,
):
    # ---- 1) start the FC weight stream immediately: it overlaps the encoder convs ----
    copies = []
    for i, (src, dst) in enumerate(((w1_hbm, w1_buf), (w2_hbm, w2_buf),
                                    (w3_hbm, w3_buf), (w4_hbm, w4_buf))):
        cp = pltpu.make_async_copy(src, dst, dma_sem.at[i])
        cp.start()
        copies.append(cp)

    # ---- 2) zero staging scratch (padding lanes / padding batch rows stay zero) ----
    xfc_ref[...] = jnp.zeros_like(xfc_ref)
    dec_in_ref[...] = jnp.zeros_like(dec_in_ref)

    # ---- 3) constant pool / unpool selection matrices, built once per layer ----
    p1_sel_e, p1_sel_o = _pool_pair_matrices(W_WIDE, W_NARROW, L1P)      # 230 -> 115
    p2_sel_e, p2_sel_o = _pool_pair_matrices(W_NARROW, W_NARROW, L2P)    # 115 -> 57
    u1_put_e, u1_put_o = _unpool_pair_matrices(W_NARROW, W_NARROW, L2P)  # 57  -> 114
    u2_put_e, u2_put_o = _unpool_pair_matrices(W_NARROW, W_WIDE, L1P)    # 115 -> 230

    # ---- 4) encoder (batch of 2, statically unrolled) ----
    masks1 = []
    masks2 = []
    for n in range(N_BATCH):
        x = x_ref[pl.ds(n, 1), :]                                               # (1, 256)
        y1 = _conv1d_roll(x, e1w_ref, PAD[0], e1s_ref[...], e1t_ref[...], roll_sign)
        p1, m1 = _maxpool2(y1, p1_sel_e, p1_sel_o)                              # (32, 128)
        masks1.append(m1)
        y2 = _conv1d_roll(p1, e2w_ref, PAD[1], e2s_ref[...], e2t_ref[...], roll_sign)
        p2, m2 = _maxpool2(y2, p2_sel_e, p2_sel_o)                              # (48, 128)
        masks2.append(m2)
        y3 = _conv1d_roll(p2, e3w_ref, PAD[2], e3s_ref[...], e3t_ref[...], roll_sign)
        # pack (64, 57) -> torch x.view(N,-1) order (flat index = c*57 + l)
        for c in range(HS[2]):
            xfc_ref[pl.ds(n, 1), pl.ds(c * L3, L3)] = y3[c:c + 1, :L3]

    # ---- 5) FC stack: bf16 weights, f32 accumulation; wait per slab, stream hidden ----
    xf = xfc_ref[...].astype(jnp.bfloat16)                                      # (16, 3712)
    copies[0].wait()
    h1 = jnp.dot(xf, w1_buf[...], preferred_element_type=jnp.float32) + b1_ref[...]
    copies[1].wait()
    enc = jnp.dot(h1.astype(jnp.bfloat16), w2_buf[...],
                  preferred_element_type=jnp.float32) + b2_ref[...]
    enc_out_ref[...] = enc[:N_BATCH, :EMB]                                      # (2, 912)
    copies[2].wait()
    h3 = jnp.dot(enc.astype(jnp.bfloat16), w3_buf[...],
                 preferred_element_type=jnp.float32) + b3_ref[...]
    copies[3].wait()
    h4_ref[...] = jnp.dot(h3.astype(jnp.bfloat16), w4_buf[...],
                          preferred_element_type=jnp.float32) + b4_ref[...]

    # ---- 6) unpack h4 (torch x.view(N, 64, 57)) into the decoder working layout ----
    for n in range(N_BATCH):
        for c in range(HS[2]):
            row = h4_ref[pl.ds(n, 1), pl.ds(c * L3, L3)]                        # (1, 57)
            dec_in_ref[pl.ds(n * HS[2] + c, 1), pl.ds(0, L3)] = row

    # ---- 7) decoder (ConvTranspose(stride=1) == Conv with flipped kernel, pad K-1-p) ----
    for n in range(N_BATCH):
        z = dec_in_ref[pl.ds(n * HS[2], HS[2]), :]                              # (64, 128)
        d1 = _conv1d_roll(z, d1w_ref, KS[3] - 1 - PAD[3],
                          d1s_ref[...], d1t_ref[...], roll_sign)                # (48, 128)
        u1 = _maxunpool2(d1, masks2[n], u1_put_e, u1_put_o)                     # (48, 128)
        d2 = _conv1d_roll(u1, d2w_ref, KS[4] - 1 - PAD[4],
                          d2s_ref[...], d2t_ref[...], roll_sign)                # (32, 128)
        u2 = _maxunpool2(d2, masks1[n], u2_put_e, u2_put_o)                     # (32, 256)
        d3 = _conv1d_roll(u2, d3w_ref, KS[5] - 1 - PAD[5],
                          d3s_ref[...], d3t_ref[...], roll_sign)                # (1, 256)
        dec_out_ref[pl.ds(n, 1), :] = d3[:, :L_IN]


# ------------------------------ pallas wrapper -------------------------------

def autoencoder_forward(params, x, roll_sign=1):
    n = x.shape[0]
    assert n == N_BATCH, "kernel is specialized for batch = 2"
    x2d = x.reshape(n, L_IN)
    xp = jnp.pad(x2d, ((0, 0), (0, W_WIDE - L_IN)))          # zero lanes 230..255

    vmem = pl.BlockSpec(memory_space=pltpu.MemorySpace.VMEM)
    hbm = pl.BlockSpec(memory_space=pl.ANY)

    encoded, decoded = pl.pallas_call(
        partial(_fused_forward_kernel, roll_sign=roll_sign),
        out_shape=(jax.ShapeDtypeStruct((N_BATCH, EMB), jnp.float32),
                   jax.ShapeDtypeStruct((N_BATCH, L_IN), jnp.float32)),
        in_specs=[vmem] * 23 + [hbm] * 4,
        out_specs=(vmem, vmem),
        scratch_shapes=[
            pltpu.VMEM((FLATTEN_P, FC1_P), jnp.bfloat16),    # fc1 weight slab (14.3 MB)
            pltpu.VMEM((FC1_P, EMB_P), jnp.bfloat16),        # fc2 weight slab ( 3.9 MB)
            pltpu.VMEM((EMB_P, FC1_P), jnp.bfloat16),        # fc3 weight slab ( 3.9 MB)
            pltpu.VMEM((FC1_P, FLATTEN_P), jnp.bfloat16),    # fc4 weight slab (14.3 MB)
            pltpu.VMEM((M_PAD, FLATTEN_P), jnp.float32),     # flattened FC input staging
            pltpu.VMEM((M_PAD, FLATTEN_P), jnp.float32),     # fc4 output staging
            pltpu.VMEM((N_BATCH * HS[2], W_NARROW), jnp.float32),  # decoder input layout
            pltpu.SemaphoreType.DMA((4,)),
        ],
        compiler_params=pltpu.CompilerParams(
            vmem_limit_bytes=56 * 1024 * 1024),              # <= v7x 64 MiB physical
    )(xp,
      params["enc1_w"], params["enc1_scale"], params["enc1_shift"],
      params["enc2_w"], params["enc2_scale"], params["enc2_shift"],
      params["enc3_w"], params["enc3_scale"], params["enc3_shift"],
      params["dec1_w"], params["dec1_scale"], params["dec1_shift"],
      params["dec2_w"], params["dec2_scale"], params["dec2_shift"],
      params["dec3_w"], params["dec3_scale"], params["dec3_shift"],
      params["fc1_b"], params["fc2_b"], params["fc3_b"], params["fc4_b"],
      params["fc1_w"], params["fc2_w"], params["fc3_w"], params["fc4_w"])

    return encoded, decoded.reshape(n, 1, L_IN)


# ------------------------- roll-direction runtime probe ----------------------

def _roll_probe_kernel(x_ref, o_ref):
    o_ref[...] = pltpu.roll(x_ref[...], shift=1, axis=1)


def detect_roll_sign():
    """Pin down pltpu.roll's lane-rotation direction on this backend.

    Returns +1 if it follows jnp.roll semantics (out[i] = x[i - shift]), else -1.
    The conv taps only need a consistent static lane shift, so either answer
    yields an exact kernel; probing removes the sign ambiguity at zero risk.
    """
    x = jnp.tile(jnp.arange(128, dtype=jnp.float32)[None, :], (8, 1))
    y = pl.pallas_call(
        _roll_probe_kernel,
        out_shape=jax.ShapeDtypeStruct((8, 128), jnp.float32),
        in_specs=[pl.BlockSpec(memory_space=pltpu.MemorySpace.VMEM)],
        out_specs=pl.BlockSpec(memory_space=pltpu.MemorySpace.VMEM),
    )(x)
    return 1 if float(y[0, 1]) < 0.5 else -1


# --------------------------- parameter generation ----------------------------

def init_params(key):
    keys = iter(jax.random.split(key, 64))

    def nrm(shape, fan_in):
        return (jax.random.normal(next(keys), shape, jnp.float32)
                / jnp.sqrt(jnp.float32(fan_in)))

    params = {}

    def conv_block(name, c_in, c_out, k, with_bn):
        w = nrm((c_out, c_in, k), c_in * k)              # torch Conv1d layout
        b = nrm((c_out,), c_in * k)
        if with_bn:                                      # eval-mode BN folded into affine
            gamma = 1.0 + 0.1 * nrm((c_out,), 1)
            beta = 0.1 * nrm((c_out,), 1)
            mean = 0.1 * nrm((c_out,), 1)
            var = 1.0 + 0.1 * jnp.abs(nrm((c_out,), 1))
            scale = gamma / jnp.sqrt(var + BN_EPS)
            shift = scale * (b - mean) + beta
        else:
            scale = jnp.ones((c_out,), jnp.float32)
            shift = b
        params[name + "_w"] = jnp.transpose(w, (2, 0, 1))        # (K, C_out, C_in)
        params[name + "_scale"] = scale.reshape(c_out, 1)
        params[name + "_shift"] = shift.reshape(c_out, 1)

    def convT_block(name, c_in, c_out, k):
        wt = nrm((c_in, c_out, k), c_in * k)             # torch ConvTranspose1d layout
        b = nrm((c_out,), c_in * k)
        # stride-1 ConvTranspose == Conv with flipped kernel and swapped channels.
        params[name + "_w"] = jnp.transpose(jnp.flip(wt, axis=2), (2, 1, 0))
        params[name + "_scale"] = jnp.ones((c_out, 1), jnp.float32)
        params[name + "_shift"] = b.reshape(c_out, 1)

    def fc_block(name, d_in, d_out, d_in_p, d_out_p):
        w = nrm((d_out, d_in), d_in)                     # torch Linear layout (out, in)
        b = nrm((d_out,), d_in)
        wt = jnp.zeros((d_in_p, d_out_p), jnp.float32).at[:d_in, :d_out].set(w.T)
        bp = jnp.zeros((1, d_out_p), jnp.float32).at[0, :d_out].set(b)
        params[name + "_w"] = wt.astype(jnp.bfloat16)    # lane-padded, streamed in bf16
        params[name + "_b"] = bp                         # f32 epilogue bias

    conv_block("enc1", 1, HS[0], KS[0], True)
    conv_block("enc2", HS[0], HS[1], KS[1], True)
    conv_block("enc3", HS[1], HS[2], KS[2], True)
    convT_block("dec1", HS[2], HS[1], KS[3])
    convT_block("dec2", HS[1], HS[0], KS[4])
    convT_block("dec3", HS[0], 1, KS[5])
    fc_block("fc1", FLATTEN, FC1, FLATTEN_P, FC1_P)
    fc_block("fc2", FC1, EMB, FC1_P, EMB_P)
    fc_block("fc3", EMB, FC1, EMB_P, FC1_P)
    fc_block("fc4", FC1, FLATTEN, FC1_P, FLATTEN_P)
    return params


# --------------------------------- driver ------------------------------------

if __name__ == "__main__":
    roll_sign = detect_roll_sign()

    key = jax.random.PRNGKey(0)
    pkey, xkey = jax.random.split(key)
    params = init_params(pkey)
    # The torch __init__ FC sizing hard-codes an input length of 230 (NCL, C=1).
    x = jax.random.normal(xkey, (N_BATCH, 1, L_IN), dtype=jnp.float32)

    fwd = jax.jit(lambda p, inp: autoencoder_forward(p, inp, roll_sign))
    encoded, decoded = fwd(params, x)
    jax.block_until_ready((encoded, decoded))

    assert encoded.shape == (N_BATCH, EMB), encoded.shape          # (2, 912)
    assert decoded.shape == (N_BATCH, 1, L_IN), decoded.shape      # (2, 1, 230)
    assert bool(jnp.all(jnp.isfinite(encoded))) and bool(jnp.all(jnp.isfinite(decoded)))
    print("KERNEL_OK")
</pallas_src>

<mosaic_0001>
module attributes {stable_mosaic.version = 11 : i64} {
  func.func @_roll_probe_kernel(%arg0: memref<8x128xf32, #tpu.memory_space<vmem>>, %arg1: memref<8x128xf32, #tpu.memory_space<vmem>>) attributes {dimension_semantics = [], scalar_prefetch = 0 : i64, scratch_operands = 0 : i64, tpu.core_type = #tpu.core_type<tc>} {
    %c0 = arith.constant 0 : index
    %c0_0 = arith.constant 0 : index
    %0 = vector.load %arg0[%c0, %c0_0] : memref<8x128xf32, #tpu.memory_space<vmem>>, vector<8x128xf32>
    %c1_i32 = arith.constant 1 : i32
    %1 = tpu.dynamic_rotate %0 by %c1_i32 dim 1 : vector<8x128xf32>, i32 -> vector<8x128xf32>
    %c0_1 = arith.constant 0 : index
    %c0_2 = arith.constant 0 : index
    %2 = vector.load %arg1[%c0_1, %c0_2] : memref<8x128xf32, #tpu.memory_space<vmem>>, vector<8x128xf32>
    tpu.vector_store %arg1[%c0_1, %c0_2], %1 {strides = array<i32>} : memref<8x128xf32, #tpu.memory_space<vmem>>, vector<8x128xf32>,
    return
  }
}

</mosaic_0001>

<llo_original>
// kernel: tpu_custom_call.1
$region0: #{tpu_custom_call.1}
  #allocation0 [shape = 'u32[]', space=smem, size = 0x4, offset = 0x4, fixed_abs, tag = 'smem constant byte address 0x4 - core index']
  #allocation1 [shape = 'u32[144,128]{1,0:T(1,128)}', space=vmem, size = 0x12000, scoped, tag = 'internal scratch']
  %s0 = inlined_call_operand.hbm [shape: f32[8,128], index: 0, kind: input, shape index: {}]
  %s1 = inlined_call_operand.hbm [shape: f32[8,128], index: 1, kind: output, shape index: {}]
  %s2 = sld [smem:[#allocation0]]
  $region18: #{tpu_custom_call.1} parent=0
    _
  %s4 = ssub.s32 1, %s2
  %s5 = scalar_select 0, %s4, %s2
  $region1: #{tpu_custom_call.1} parent=0
    #allocation2 [shape = 'u8[4096]{0}', space=vmem, size = 0x1000, scoped, tag = 'input window, operand 0, single buffered']
    #allocation3 [shape = 's32[1]{0}', space=sflag, size = 0x4, scoped, tag = 'scoped memory for tpu_custom_call.1']
    #allocation4 [shape = 's32[1]{0}', space=sflag, size = 0x4, scoped, tag = 'scoped memory for tpu_custom_call.1']
    #allocation5 [shape = 'u8[4096]{0}', space=vmem, size = 0x1000, scoped, tag = 'output window, operand 0, single buffered']
    %6 = vsyncpa [#allocation3], 0
    %7 = vsyncpa [#allocation4], 0
    // Predicated region
    $region2: #{tpu_custom_call.1} parent=1 // pred_check
      _
    $region3: #{tpu_custom_call.1} parent=1 // pred_check_branch
      %9 = sbr.rel (0) target = $region5
    $region4: #{tpu_custom_call.1} parent=1 // pred_region
      %s11 = ssub.s32 128, 128
      %12 = vsyncadd [#allocation3], %s11
      %s14 = sshll.u32 [#allocation2], 4
      %s15 = int_to_ptr.vmem [resolvable:$true] %s14
      %17 = dma.hbm_to_vmem [thread:$0]  %s0, 128, %s15, [#allocation3]
    $region5: #{tpu_custom_call.1} parent=1 // pred_fallthru
      _
    // Predicated region
    $region6: #{tpu_custom_call.1} parent=1 // pred_check
      _
    $region7: #{tpu_custom_call.1} parent=1 // pred_check_branch
      %19 = sbr.rel (0) target = $region9
    $region8: #{tpu_custom_call.1} parent=1 // pred_region
      %20 = dma.done [#allocation3], 128
    $region9: #{tpu_custom_call.1} parent=1 // pred_fallthru
      _
    %v21 = vld [vmem:[#allocation2] sm:$0xff]
    %22 = vrot.lane.b32.xlu0 %v21, 1
    %v23 = vpop.permute.xlu0 %22
    %24 = vst [vmem:[#allocation5] sm:$0xff] %v23
    // Predicated region
    $region10: #{tpu_custom_call.1} parent=1 // pred_check
      _
    $region11: #{tpu_custom_call.1} parent=1 // pred_check_branch
      %26 = sbr.rel (0) target = $region13
    $region12: #{tpu_custom_call.1} parent=1 // pred_region
      %s28 = ssub.s32 128, 128
      %29 = vsyncadd [#allocation4], %s28
      %s31 = sshll.u32 [#allocation5], 4
      %s32 = int_to_ptr.vmem [resolvable:$true] %s31
      %34 = dma.vmem_to_hbm [thread:$0]  %s32, 128, %s1, [#allocation4]
    $region13: #{tpu_custom_call.1} parent=1 // pred_fallthru
      _
    // Predicated region
    $region14: #{tpu_custom_call.1} parent=1 // pred_check
      _
    $region15: #{tpu_custom_call.1} parent=1 // pred_check_branch
      %36 = sbr.rel (0) target = $region17
    $region16: #{tpu_custom_call.1} parent=1 // pred_region
      %37 = dma.done [#allocation4], 128
    $region17: #{tpu_custom_call.1} parent=1 // pred_fallthru
      _
    %38 = vsyncpa [#allocation3], 1
    %39 = vsyncpa [#allocation4], 1

</llo_original>
